<compile_context>
chip_gen: v6e
topology: v6e:2x2x1
jax: 0.10.0
libtpu: 0.0.40
codegen_flags: <defaults>
</compile_context>

<pallas_src>
import functools

import jax
import jax.numpy as jnp
from jax import lax
from jax.experimental import pallas as pl
from jax.experimental.pallas import tpu as pltpu


def gdra_kernel(lamda_ref, hfull_ref, htile_ref, w_ref, a1_ref, a2row_ref,
                adj_ref, o_ref, *, alpha, matmul_dtype):
    lam = lamda_ref[0]

    # --- Wh = h @ W (MXU). Full Wh needed for columns / aggregation; the
    #     row-tile slice is recomputed from the tiled h block (tiny matmul,
    #     bit-identical to the corresponding rows of the full product). ---
    w = w_ref[...].astype(matmul_dtype)
    wh_full = jnp.dot(hfull_ref[...].astype(matmul_dtype), w,
                      preferred_element_type=jnp.float32)          # (N, Fout)
    wh_tile = jnp.dot(htile_ref[...].astype(matmul_dtype), w,
                      preferred_element_type=jnp.float32)          # (tq, Fout)

    # --- attention logits: e = leaky_relu(Wh@a1 + (Wh@a2)^T) ---
    wh1 = jnp.dot(wh_tile, a1_ref[...],
                  preferred_element_type=jnp.float32)              # (tq, 1)
    # Lane-dense (1, N) row directly: a2_row · Wh^T (no (N,1)->(1,N) transpose).
    wh2_row = lax.dot_general(
        a2row_ref[...], wh_full,
        dimension_numbers=(((1,), (1,)), ((), ())),
        preferred_element_type=jnp.float32)                        # (1, N)
    e = wh1 + wh2_row                                              # (tq, N)
    e = jnp.where(e > 0, e, alpha * e)                             # LeakyReLU(alpha)

    # --- mask recompute with dischange == 0: outcome depends only on the
    #     scalar sign of lamda. Keep both gates (ordering: zeros wins) so the
    #     lamda <= 0 behaviour of the PyTorch module is preserved. ---
    force_ones = (0.0 > lam).astype(jnp.float32)    # dischange >  lamda
    force_zero = (0.0 < -lam).astype(jnp.float32)   # dischange < -lamda
    valid = jnp.where(adj_ref[...].astype(jnp.float32) > 0.0, 1.0, 0.0)  # (tq, N)
    valid = jnp.maximum(valid, force_ones)          # where(0 >  lamda, 1, mask)
    valid = valid * (1.0 - force_zero)              # where(0 < -lamda, 0, mask)

    # --- masked softmax over dim=1 (scalar -9e15, no (N,N) constants) ---
    att = jnp.where(valid > 0.0, e, -9.0e15)
    m = jnp.max(att, axis=1, keepdims=True)
    p = jnp.exp(att - m)
    s = jnp.sum(p, axis=1, keepdims=True)
    att = p * (1.0 / s)                             # one divide per row
    # F.dropout(attention, p, training=False) -> identity (eval mode).

    # --- aggregate + ELU (concat=True branch) ---
    out = jnp.dot(att.astype(matmul_dtype), wh_full.astype(matmul_dtype),
                  preferred_element_type=jnp.float32)              # (tq, Fout)
    o_ref[...] = jnp.where(out > 0, out, jnp.exp(out) - 1.0)       # ELU(1.0)


def _pick_row_tile(n):
    # Multiples of 32 keep f32 / int8 sublane tiling happy; otherwise fall back
    # to a single full-height block (full-dim blocks are always legal).
    for t in (512, 256, 128, 64, 32):
        if n >= t and n % t == 0:
            return t
    return n


def gdra_forward(h, W, a, adj, lamda, *, alpha, matmul_dtype=jnp.float32):
    n, fin = h.shape
    fout = W.shape[1]
    a1 = a[:fout, :]                        # (Fout, 1)
    a2_row = a[fout:, :].reshape(1, fout)   # (1, Fout) — lane-dense LHS operand
    lam = jnp.asarray(lamda, jnp.float32).reshape(1)
    adj_i8 = (adj > 0).astype(jnp.int8)     # 4x less HBM traffic than f32 mask
    tq = _pick_row_tile(n)

    kernel = functools.partial(gdra_kernel, alpha=alpha, matmul_dtype=matmul_dtype)
    return pl.pallas_call(
        kernel,
        out_shape=jax.ShapeDtypeStruct((n, fout), jnp.float32),
        grid=(n // tq,),
        in_specs=[
            pl.BlockSpec(memory_space=pltpu.SMEM),        # lamda scalar (SMEM)
            pl.BlockSpec((n, fin), lambda i: (0, 0)),     # h (full; DMA'd once)
            pl.BlockSpec((tq, fin), lambda i: (i, 0)),    # h row tile
            pl.BlockSpec((fin, fout), lambda i: (0, 0)),  # W
            pl.BlockSpec((fout, 1), lambda i: (0, 0)),    # a1
            pl.BlockSpec((1, fout), lambda i: (0, 0)),    # a2 as a row
            pl.BlockSpec((tq, n), lambda i: (i, 0)),      # adjacency row tile (int8)
        ],
        out_specs=pl.BlockSpec((tq, fout), lambda i: (i, 0)),
        compiler_params=pltpu.CompilerParams(
            dimension_semantics=("parallel",)),           # megacore-friendly row axis
    )(lam, h, h, W, a1, a2_row, adj_i8)
    # TODO(synk): for very large N, additionally tile the column axis with an
    # online softmax (flash-style) and raise vmem_limit_bytes; per-row-tile
    # VMEM here is O(tq*N), fine up to N in the several-thousands.


def gdra_reference(h, W, a, adj, lamda, *, alpha, matmul_dtype=jnp.float32):
    """Pure-JAX reference mirroring the PyTorch forward (eval mode)."""
    n = h.shape[0]
    fout = W.shape[1]
    wh = jnp.dot(h.astype(matmul_dtype), W.astype(matmul_dtype),
                 preferred_element_type=jnp.float32)
    e = wh @ a[:fout] + (wh @ a[fout:]).T
    e = jnp.where(e > 0, e, alpha * e)
    dis0 = jnp.zeros((n, n), jnp.float32)
    mask = (adj > 0).astype(jnp.float32)
    mask = jnp.where(dis0 > lamda, jnp.ones_like(mask), mask)
    mask = jnp.where(dis0 < -lamda, jnp.zeros_like(mask), mask)
    att = jnp.where(mask > 0, e, jnp.full_like(e, -9.0e15))
    att = jax.nn.softmax(att, axis=1)
    out = jnp.dot(att.astype(matmul_dtype), wh.astype(matmul_dtype),
                  preferred_element_type=jnp.float32)
    return jnp.where(out > 0, out, jnp.exp(out) - 1.0)


if __name__ == "__main__":
    # Hyper-parameters (stand-ins for the argparse values in the original).
    alpha = 0.2      # LeakyReLU slope
    lamda = 0.5

    N, F_IN, F_OUT = 64, 32, 16

    key = jax.random.PRNGKey(0)
    k_h, k_w, k_a, k_adj = jax.random.split(key, 4)

    h = jax.random.normal(k_h, (N, F_IN), jnp.float32)

    # xavier_uniform_ with gain=1.414 (deterministic synthetic init).
    gain = 1.414
    w_bound = gain * (6.0 / (F_IN + F_OUT)) ** 0.5
    W = jax.random.uniform(k_w, (F_IN, F_OUT), jnp.float32, -w_bound, w_bound)
    a_bound = gain * (6.0 / (2 * F_OUT + 1)) ** 0.5
    a = jax.random.uniform(k_a, (2 * F_OUT, 1), jnp.float32, -a_bound, a_bound)

    # Synthetic adjacency (the global `mask = adj` of the original) as int8,
    # with self-loops so every softmax row has at least one valid entry.
    adj = jax.random.uniform(k_adj, (N, N)) < 0.3
    adj = jnp.logical_or(adj, jnp.eye(N, dtype=bool)).astype(jnp.int8)

    # f32 MXU path: tight check against the f32 reference.
    out = jax.block_until_ready(gdra_forward(h, W, a, adj, lamda, alpha=alpha))
    ref = gdra_reference(h, W, a, adj, lamda, alpha=alpha)
    assert out.shape == (N, F_OUT)
    assert jnp.allclose(out, ref, atol=1e-4, rtol=1e-4)

    # Negative lamda exercises the scalar mask gates (PyTorch would force the
    # mask to all-zeros -> uniform attention).
    out_neg = jax.block_until_ready(gdra_forward(h, W, a, adj, -0.25, alpha=alpha))
    ref_neg = gdra_reference(h, W, a, adj, -0.25, alpha=alpha)
    assert jnp.allclose(out_neg, ref_neg, atol=1e-4, rtol=1e-4)

    # bf16 MXU-operand path (e / masking / softmax stay f32), compared against
    # a reference applying the same operand rounding.
    out_bf = jax.block_until_ready(
        gdra_forward(h, W, a, adj, lamda, alpha=alpha, matmul_dtype=jnp.bfloat16))
    ref_bf = gdra_reference(h, W, a, adj, lamda, alpha=alpha,
                            matmul_dtype=jnp.bfloat16)
    assert jnp.all(jnp.isfinite(out_bf))
    assert jnp.allclose(out_bf, ref_bf, atol=5e-2, rtol=5e-2)

    print("KERNEL_OK")
</pallas_src>

<mosaic_0001>
module attributes {stable_mosaic.version = 11 : i64} {
  func.func @gdra_kernel(%arg0: i32, %arg1: memref<1xf32, #tpu.memory_space<smem>>, %arg2: memref<64x32xf32, #tpu.memory_space<vmem>>, %arg3: memref<64x32xf32, #tpu.memory_space<vmem>>, %arg4: memref<32x16xf32, #tpu.memory_space<vmem>>, %arg5: memref<16x1xf32, #tpu.memory_space<vmem>>, %arg6: memref<1x16xf32, #tpu.memory_space<vmem>>, %arg7: memref<64x64xi8, #tpu.memory_space<vmem>>, %arg8: memref<64x16xf32, #tpu.memory_space<vmem>>) attributes {dimension_semantics = [#tpu.dimension_semantics<parallel>], iteration_bounds = array<i64: 1>, scalar_prefetch = 0 : i64, scratch_operands = 0 : i64, tpu.core_type = #tpu.core_type<tc>, window_params = [{transform_indices = @transform_0, window_bounds = array<i64: 1>}, {pipeline_mode = #tpu.pipeline_mode<synchronous>, transform_indices = @transform_1, window_bounds = array<i64: 64, 32>}, {transform_indices = @transform_2, window_bounds = array<i64: 64, 32>}, {pipeline_mode = #tpu.pipeline_mode<synchronous>, transform_indices = @transform_3, window_bounds = array<i64: 32, 16>}, {pipeline_mode = #tpu.pipeline_mode<synchronous>, transform_indices = @transform_4, window_bounds = array<i64: 16, 1>}, {pipeline_mode = #tpu.pipeline_mode<synchronous>, transform_indices = @transform_5, window_bounds = array<i64: 1, 16>}, {transform_indices = @transform_6, window_bounds = array<i64: 64, 64>}, {transform_indices = @transform_7, window_bounds = array<i64: 64, 16>}]} {
    %c0 = arith.constant 0 : index
    %0 = memref.load %arg1[%c0] : memref<1xf32, #tpu.memory_space<smem>>
    %c0_0 = arith.constant 0 : index
    %c0_1 = arith.constant 0 : index
    %1 = vector.load %arg4[%c0_0, %c0_1] : memref<32x16xf32, #tpu.memory_space<vmem>>, vector<32x16xf32>
    %c0_2 = arith.constant 0 : index
    %c0_3 = arith.constant 0 : index
    %2 = vector.load %arg2[%c0_2, %c0_3] : memref<64x32xf32, #tpu.memory_space<vmem>>, vector<64x32xf32>
    %cst = arith.constant dense<0.000000e+00> : vector<64x16xf32>
    %3 = tpu.matmul %2, %1, %cst {dimension_numbers = #tpu.dot_dimension_numbers<[1], [0], [0], [1], [0, 0, 1, 1], [], []>} : vector<64x32xf32>, vector<32x16xf32>, vector<64x16xf32> -> vector<64x16xf32>
    %c0_4 = arith.constant 0 : index
    %c0_5 = arith.constant 0 : index
    %4 = vector.load %arg3[%c0_4, %c0_5] : memref<64x32xf32, #tpu.memory_space<vmem>>, vector<64x32xf32>
    %cst_6 = arith.constant dense<0.000000e+00> : vector<64x16xf32>
    %5 = tpu.matmul %4, %1, %cst_6 {dimension_numbers = #tpu.dot_dimension_numbers<[1], [0], [0], [1], [0, 0, 1, 1], [], []>} : vector<64x32xf32>, vector<32x16xf32>, vector<64x16xf32> -> vector<64x16xf32>
    %c0_7 = arith.constant 0 : index
    %c0_8 = arith.constant 0 : index
    %6 = vector.load %arg5[%c0_7, %c0_8] : memref<16x1xf32, #tpu.memory_space<vmem>>, vector<16x1xf32>
    %cst_9 = arith.constant dense<0.000000e+00> : vector<64x1xf32>
    %7 = tpu.matmul %5, %6, %cst_9 {dimension_numbers = #tpu.dot_dimension_numbers<[1], [0], [0], [1], [0, 0, 1, 1], [], []>} : vector<64x16xf32>, vector<16x1xf32>, vector<64x1xf32> -> vector<64x1xf32>
    %c0_10 = arith.constant 0 : index
    %c0_11 = arith.constant 0 : index
    %8 = vector.load %arg6[%c0_10, %c0_11] : memref<1x16xf32, #tpu.memory_space<vmem>>, vector<1x16xf32>
    %cst_12 = arith.constant dense<0.000000e+00> : vector<1x64xf32>
    %9 = tpu.matmul %8, %3, %cst_12 {dimension_numbers = #tpu.dot_dimension_numbers<[1], [1], [0], [0], [0, 0, 1, 0], [], []>} : vector<1x16xf32>, vector<64x16xf32>, vector<1x64xf32> -> vector<1x64xf32>
    %10 = vector.broadcast %7 : vector<64x1xf32> to vector<64x64xf32>
    %11 = vector.broadcast %9 : vector<1x64xf32> to vector<64x64xf32>
    %12 = arith.addf %10, %11 : vector<64x64xf32>
    %cst_13 = arith.constant 0.000000e+00 : f32
    %13 = vector.broadcast %cst_13 : f32 to vector<64x64xf32>
    %14 = arith.cmpf ogt, %12, %13 : vector<64x64xf32>
    %cst_14 = arith.constant 2.000000e-01 : f32
    %15 = vector.broadcast %cst_14 : f32 to vector<64x64xf32>
    %16 = arith.mulf %15, %12 : vector<64x64xf32>
    %17 = arith.select %14, %12, %16 : vector<64x64xi1>, vector<64x64xf32>
    %cst_15 = arith.constant 0.000000e+00 : f32
    %18 = arith.cmpf olt, %0, %cst_15 : f32
    %19 = arith.extui %18 : i1 to i32
    %20 = arith.sitofp %19 : i32 to f32
    %cst_16 = arith.constant 0.000000e+00 : f32
    %21 = arith.subf %cst_16, %0 : f32
    %cst_17 = arith.constant 0.000000e+00 : f32
    %22 = arith.cmpf ogt, %21, %cst_17 : f32
    %23 = arith.extui %22 : i1 to i32
    %24 = arith.sitofp %23 : i32 to f32
    %c0_18 = arith.constant 0 : index
    %c0_19 = arith.constant 0 : index
    %25 = vector.load %arg7[%c0_18, %c0_19] : memref<64x64xi8, #tpu.memory_space<vmem>>, vector<64x64xi8>
    %26 = arith.sitofp %25 : vector<64x64xi8> to vector<64x64xf32>
    %cst_20 = arith.constant 0.000000e+00 : f32
    %27 = vector.broadcast %cst_20 : f32 to vector<64x64xf32>
    %28 = arith.cmpf ogt, %26, %27 : vector<64x64xf32>
    %cst_21 = arith.constant 1.000000e+00 : f32
    %cst_22 = arith.constant 0.000000e+00 : f32
    %29 = vector.broadcast %cst_21 : f32 to vector<64x64xf32>
    %30 = vector.broadcast %cst_22 : f32 to vector<64x64xf32>
    %31 = arith.select %28, %29, %30 : vector<64x64xi1>, vector<64x64xf32>
    %32 = vector.broadcast %20 : f32 to vector<64x64xf32>
    %33 = arith.maximumf %31, %32 : vector<64x64xf32>
    %cst_23 = arith.constant 1.000000e+00 : f32
    %34 = arith.subf %cst_23, %24 : f32
    %35 = vector.broadcast %34 : f32 to vector<64x64xf32>
    %36 = arith.mulf %33, %35 : vector<64x64xf32>
    %cst_24 = arith.constant 0.000000e+00 : f32
    %37 = vector.broadcast %cst_24 : f32 to vector<64x64xf32>
    %38 = arith.cmpf ogt, %36, %37 : vector<64x64xf32>
    %cst_25 = arith.constant -9.000000e+15 : f32
    %39 = vector.broadcast %cst_25 : f32 to vector<64x64xf32>
    %40 = arith.select %38, %17, %39 : vector<64x64xi1>, vector<64x64xf32>
    %cst_26 = arith.constant dense<0xFF800000> : vector<64xf32>
    %41 = vector.multi_reduction <maximumf>, %40, %cst_26 [1] : vector<64x64xf32> to vector<64xf32>
    %42 = vector.shape_cast %41 : vector<64xf32> to vector<64x1xf32>
    %43 = vector.broadcast %42 : vector<64x1xf32> to vector<64x64xf32>
    %44 = arith.subf %40, %43 : vector<64x64xf32>
    %45 = math.exp %44 : vector<64x64xf32>
    %cst_27 = arith.constant dense<0.000000e+00> : vector<64xf32>
    %46 = vector.multi_reduction <add>, %45, %cst_27 [1] : vector<64x64xf32> to vector<64xf32>
    %47 = vector.shape_cast %46 : vector<64xf32> to vector<64x1xf32>
    %cst_28 = arith.constant 1.000000e+00 : f32
    %48 = vector.broadcast %cst_28 : f32 to vector<64x1xf32>
    %49 = arith.divf %48, %47 : vector<64x1xf32>
    %50 = vector.broadcast %49 : vector<64x1xf32> to vector<64x64xf32>
    %51 = arith.mulf %45, %50 : vector<64x64xf32>
    %cst_29 = arith.constant dense<0.000000e+00> : vector<64x16xf32>
    %52 = tpu.matmul %51, %3, %cst_29 {dimension_numbers = #tpu.dot_dimension_numbers<[1], [0], [0], [1], [0, 0, 1, 1], [], []>} : vector<64x64xf32>, vector<64x16xf32>, vector<64x16xf32> -> vector<64x16xf32>
    %cst_30 = arith.constant 0.000000e+00 : f32
    %53 = vector.broadcast %cst_30 : f32 to vector<64x16xf32>
    %54 = arith.cmpf ogt, %52, %53 : vector<64x16xf32>
    %55 = math.exp %52 : vector<64x16xf32>
    %cst_31 = arith.constant 1.000000e+00 : f32
    %56 = vector.broadcast %cst_31 : f32 to vector<64x16xf32>
    %57 = arith.subf %55, %56 : vector<64x16xf32>
    %58 = arith.select %54, %52, %57 : vector<64x16xi1>, vector<64x16xf32>
    %c0_32 = arith.constant 0 : index
    %c0_33 = arith.constant 0 : index
    %59 = vector.load %arg8[%c0_32, %c0_33] : memref<64x16xf32, #tpu.memory_space<vmem>>, vector<64x16xf32>
    tpu.vector_store %arg8[%c0_32, %c0_33], %58 {strides = array<i32>} : memref<64x16xf32, #tpu.memory_space<vmem>>, vector<64x16xf32>,
    return
  }
  func.func @transform_0(%arg0: i32) -> i32 {
    %c0_i32 = arith.constant 0 : i32
    %c0_i32_0 = arith.constant 0 : i32
    return %c0_i32 : i32
  }
  func.func @transform_1(%arg0: i32) -> (i32, i32) {
    %c0_i32 = arith.constant 0 : i32
    %c0_i32_0 = arith.constant 0 : i32
    %c0_i32_1 = arith.constant 0 : i32
    return %c0_i32, %c0_i32_0 : i32, i32
  }
  func.func @transform_2(%arg0: i32) -> (i32, i32) {
    %c0_i32 = arith.constant 0 : i32
    %c0_i32_0 = arith.constant 0 : i32
    return %arg0, %c0_i32 : i32, i32
  }
  func.func @transform_3(%arg0: i32) -> (i32, i32) {
    %c0_i32 = arith.constant 0 : i32
    %c0_i32_0 = arith.constant 0 : i32
    %c0_i32_1 = arith.constant 0 : i32
    return %c0_i32, %c0_i32_0 : i32, i32
  }
  func.func @transform_4(%arg0: i32) -> (i32, i32) {
    %c0_i32 = arith.constant 0 : i32
    %c0_i32_0 = arith.constant 0 : i32
    %c0_i32_1 = arith.constant 0 : i32
    return %c0_i32, %c0_i32_0 : i32, i32
  }
  func.func @transform_5(%arg0: i32) -> (i32, i32) {
    %c0_i32 = arith.constant 0 : i32
    %c0_i32_0 = arith.constant 0 : i32
    %c0_i32_1 = arith.constant 0 : i32
    return %c0_i32, %c0_i32_0 : i32, i32
  }
  func.func @transform_6(%arg0: i32) -> (i32, i32) {
    %c0_i32 = arith.constant 0 : i32
    %c0_i32_0 = arith.constant 0 : i32
    return %arg0, %c0_i32 : i32, i32
  }
  func.func @transform_7(%arg0: i32) -> (i32, i32) {
    %c0_i32 = arith.constant 0 : i32
    %c0_i32_0 = arith.constant 0 : i32
    return %arg0, %c0_i32 : i32, i32
  }
}

</mosaic_0001>

<llo_original>
// kernel: tpu_custom_call.1
$region0: #{tpu_custom_call.1}
  #allocation0 [shape = 'u32[]', space=smem, size = 0x4, offset = 0x4, fixed_abs, tag = 'smem constant byte address 0x4 - core index']
  #allocation1 [shape = 'u32[144,128]{1,0:T(1,128)}', space=vmem, size = 0x12000, scoped, tag = 'internal scratch']
  #allocation2 [shape = 'f32[1]{0:T(128)S(6)}', space=smem, size = 0x200, scoped, tag = 'scoped memory for tpu_custom_call.1']
  %s0 = inlined_call_operand.<no memory space> [shape: f32[1], index: 0, kind: input, shape index: {}]
  %s1 = inlined_call_operand.vmem [shape: f32[64,32], index: 1, kind: input, shape index: {}]
  %s2 = inlined_call_operand.vmem [shape: f32[64,32], index: 2, kind: input, shape index: {}]
  %s3 = inlined_call_operand.vmem [shape: f32[32,16], index: 3, kind: input, shape index: {}]
  %s4 = inlined_call_operand.vmem [shape: f32[16,1], index: 4, kind: input, shape index: {}]
  %s5 = inlined_call_operand.vmem [shape: f32[1,16], index: 5, kind: input, shape index: {}]
  %s6 = inlined_call_operand.vmem [shape: s8[64,64], index: 6, kind: input, shape index: {}]
  %s7 = inlined_call_operand.vmem [shape: f32[64,16], index: 7, kind: output, shape index: {}]
  %s8 = sld [smem:[#allocation0]]
  $region38: #{tpu_custom_call.1} parent=0
    _
  %s10 = ssub.s32 1, %s8
  %s11 = scalar_select 0, %s10, %s8
  %12 = sst [smem:[#allocation2]] %s0
  // Predicated region
  $region2: #{tpu_custom_call.1} parent=0 // pred_check
    _
  $region3: #{tpu_custom_call.1} parent=0 // pred_check_branch
    %14 = sbr.rel (0) target = $region5
  $region4: #{tpu_custom_call.1} parent=0 // pred_region
    _
  $region5: #{tpu_custom_call.1} parent=0 // pred_fallthru
    _
  // Predicated region
  $region6: #{tpu_custom_call.1} parent=0 // pred_check
    _
  $region7: #{tpu_custom_call.1} parent=0 // pred_check_branch
    %16 = sbr.rel (0) target = $region9
  $region8: #{tpu_custom_call.1} parent=0 // pred_region
    _
  $region9: #{tpu_custom_call.1} parent=0 // pred_fallthru
    _
  // Predicated region
  $region10: #{tpu_custom_call.1} parent=0 // pred_check
    _
  $region11: #{tpu_custom_call.1} parent=0 // pred_check_branch
    %18 = sbr.rel (0) target = $region13
  $region12: #{tpu_custom_call.1} parent=0 // pred_region
    _
  $region13: #{tpu_custom_call.1} parent=0 // pred_fallthru
    _
  // Predicated region
  $region14: #{tpu_custom_call.1} parent=0 // pred_check
    _
  $region15: #{tpu_custom_call.1} parent=0 // pred_check_branch
    %20 = sbr.rel (0) target = $region17
  $region16: #{tpu_custom_call.1} parent=0 // pred_region
    _
  $region17: #{tpu_custom_call.1} parent=0 // pred_fallthru
    _
  // Predicated region
  $region18: #{tpu_custom_call.1} parent=0 // pred_check
    _
  $region19: #{tpu_custom_call.1} parent=0 // pred_check_branch
    %22 = sbr.rel (0) target = $region21
  $region20: #{tpu_custom_call.1} parent=0 // pred_region
    _
  $region21: #{tpu_custom_call.1} parent=0 // pred_fallthru
    _
  // Predicated region
  $region22: #{tpu_custom_call.1} parent=0 // pred_check
    _
  $region23: #{tpu_custom_call.1} parent=0 // pred_check_branch
    %24 = sbr.rel (0) target = $region25
  $region24: #{tpu_custom_call.1} parent=0 // pred_region
    _
  $region25: #{tpu_custom_call.1} parent=0 // pred_fallthru
    _
  // Predicated region
  $region26: #{tpu_custom_call.1} parent=0 // pred_check
    _
  $region27: #{tpu_custom_call.1} parent=0 // pred_check_branch
    %26 = sbr.rel (0) target = $region29
  $region28: #{tpu_custom_call.1} parent=0 // pred_region
    _
  $region29: #{tpu_custom_call.1} parent=0 // pred_fallthru
    _
  %s27 = sld [smem:[#allocation2]]
  %v28 = vld [vmem:[%s3] sm:$0xff]
  %v29 = vld [vmem:[%s3 + $0x8] sm:$0xff]
  %v30 = vld [vmem:[%s3 + $0x10] sm:$0xff]
  %v31 = vld [vmem:[%s3 + $0x18] sm:$0xff]
  %v32 = vld [vmem:[%s1] sm:$0xff]
  %v33 = vld [vmem:[%s1 + $0x8] sm:$0xff]
  %v34 = vld [vmem:[%s1 + $0x10] sm:$0xff]
  %v35 = vld [vmem:[%s1 + $0x18] sm:$0xff]
  %v36 = vld [vmem:[%s1 + $0x20] sm:$0xff]
  %v37 = vld [vmem:[%s1 + $0x28] sm:$0xff]
  %v38 = vld [vmem:[%s1 + $0x30] sm:$0xff]
  %v39 = vld [vmem:[%s1 + $0x38] sm:$0xff]
  %vm40 = vcmask 261120
  %v42 = vsel %vm40, %v32, 0
  %v45 = vsel %vm40, %v33, 0
  %v48 = vsel %vm40, %v34, 0
  %v51 = vsel %vm40, %v35, 0
  %v54 = vsel %vm40, %v36, 0
  %v57 = vsel %vm40, %v37, 0
  %v60 = vsel %vm40, %v38, 0
  %v63 = vsel %vm40, %v39, 0
  %65 = vmatprep.subr.mxu0 0.0
  %66 = vmatpush1.msra.mxu0 0.0
  %67 = vmatprep.subr.mxu0 0.0
  %68 = vmatpush1.msra.mxu0 0.0
  %69 = vmatprep.subr.mxu0 0.0
  %70 = vmatpush1.msra.mxu0 0.0
  %71 = vmatprep.subr.mxu0 0.0
  %72 = vmatpush1.msra.mxu0 0.0
  %73 = vmatprep.subr.mxu0 0.0
  %74 = vmatpush1.msra.mxu0 0.0
  %75 = vmatprep.subr.mxu0 0.0
  %76 = vmatpush1.msra.mxu0 0.0
  %77 = vmatprep.subr.mxu0 0.0
  %78 = vmatpush1.msra.mxu0 0.0
  %79 = vmatprep.subr.mxu0 0.0
  %80 = vmatpush1.msra.mxu0 0.0
  %81 = vmatprep.subr.mxu0 0.0
  %82 = vmatpush1.msra.mxu0 0.0
  %83 = vmatprep.subr.mxu0 0.0
  %84 = vmatpush1.msra.mxu0 0.0
  %85 = vmatprep.subr.mxu0 0.0
  %86 = vmatpush1.msra.mxu0 0.0
  %87 = vmatprep.subr.mxu0 0.0
  %88 = vmatpush1.msra.mxu0 0.0
  %89 = vmatprep.subr.mxu0 0.0
  %90 = vmatpush1.msra.mxu0 %v31
  %91 = vmatprep.subr.mxu0 0.0
  %92 = vmatpush1.msra.mxu0 %v30
  %93 = vmatprep.subr.mxu0 0.0
  %94 = vmatpush1.msra.mxu0 %v29
  %95 = vmatprep.subr.mxu0 0.0
  %96 = vmatpush1.msra.mxu0 %v28
  %97 = vmatprep.subr.mxu0 0.0
  %98 = vmatpush2.msra.mxu0 0.0
  %99 = vmatprep.subr.mxu0 0.0
  %100 = vmatpush2.msra.mxu0 0.0
  %101 = vmatprep.subr.mxu0 0.0
  %102 = vmatpush2.msra.mxu0 0.0
  %103 = vmatprep.subr.mxu0 0.0
  %104 = vmatpush2.msra.mxu0 0.0
  %105 = vmatprep.subr.mxu0 0.0
  %106 = vmatpush2.msra.mxu0 0.0
  %107 = vmatprep.subr.mxu0 0.0
  %108 = vmatpush2.msra.mxu0 0.0
  %109 = vmatprep.subr.mxu0 0.0
  %110 = vmatpush2.msra.mxu0 0.0
  %111 = vmatprep.subr.mxu0 0.0
  %112 = vmatpush2.msra.mxu0 0.0
  %113 = vmatprep.subr.mxu0 0.0
  %114 = vmatpush2.msra.mxu0 0.0
  %115 = vmatprep.subr.mxu0 0.0
  %116 = vmatpush2.msra.mxu0 0.0
  %117 = vmatprep.subr.mxu0 0.0
  %118 = vmatpush2.msra.mxu0 0.0
  %119 = vmatprep.subr.mxu0 0.0
  %120 = vmatpush2.msra.mxu0 0.0
  %121 = vmatprep.subr.mxu0 0.0
  %122 = vmatpush2.msra.mxu0 0.0
  %123 = vmatprep.subr.mxu0 0.0
  %124 = vmatpush2.msra.mxu0 0.0
  %125 = vmatprep.subr.mxu0 0.0
  %126 = vmatpush2.msra.mxu0 0.0
  %127 = vmatprep.subr.mxu0 0.0
  %128 = vmatpush2.msra.mxu0 0.0
  %129 = vmatprep.mubr.f32.mxu0 0.0
  %130 = vmatmul.mubr.f32.gmra.mxu0 %v42
  %v131 = vpop.f32.mrf.mxu0
  %v132 = vadd.f32 0.0, %v131
  %v133 = vpop.f32.mrf.mxu0
  %134 = vmatprep.mubr.f32.mxu0 0.0
  %135 = vmatmul.mubr.f32.gmra.mxu0 %v45
  %v136 = vpop.f32.mrf.mxu0
  %v137 = vadd.f32 0.0, %v136
  %v138 = vpop.f32.mrf.mxu0
  %139 = vmatprep.mubr.f32.mxu0 0.0
  %140 = vmatmul.mubr.f32.gmra.mxu0 %v48
  %v141 = vpop.f32.mrf.mxu0
  %v142 = vadd.f32 0.0, %v141
  %v143 = vpop.f32.mrf.mxu0
  %144 = vmatprep.mubr.f32.mxu0 0.0
  %145 = vmatmul.mubr.f32.gmra.mxu0 %v51
  %v146 = vpop.f32.mrf.mxu0
  %v147 = vadd.f32 0.0, %v146
  %v148 = vpop.f32.mrf.mxu0
  %149 = vmatprep.mubr.f32.mxu0 0.0
  %150 = vmatmul.mubr.f32.gmra.mxu0 %v54
  %v151 = vpop.f32.mrf.mxu0
  %v152 = vadd.f32 0.0, %v151
  %v153 = vpop.f32.mrf.mxu0
  %154 = vmatprep.mubr.f32.mxu0 0.0
  %155 = vmatmul.mubr.f32.gmra.mxu0 %v57
  %v156 = vpop.f32.mrf.mxu0
  %v157 = vadd.f32 0.0, %v156
  %v158 = vpop.f32.mrf.mxu0
  %159 = vmatprep.mubr.f32.mxu0 0.0
  %160 = vmatmul.mubr.f32.gmra.mxu0 %v60
  %v161 = vpop.f32.mrf.mxu0
  %v162 = vadd.f32 0.0, %v161
  %v163 = vpop.f32.mrf.mxu0
  %164 = vmatprep.mubr.f32.mxu0 0.0
  %165 = vmatmul.mubr.f32.gmra.mxu0 %v63
  %v166 = vpop.f32.mrf.mxu0
  %v167 = vadd.f32 0.0, %v166
  %v168 = vpop.f32.mrf.mxu0
  %169 = vdwg.mxu0
  %v170 = vld [vmem:[%s2] sm:$0xff]
  %v171 = vld [vmem:[%s2 + $0x8] sm:$0xff]
  %v172 = vld [vmem:[%s2 + $0x10] sm:$0xff]
  %v173 = vld [vmem:[%s2 + $0x18] sm:$0xff]
  %v174 = vld [vmem:[%s2 + $0x20] sm:$0xff]
  %v175 = vld [vmem:[%s2 + $0x28] sm:$0xff]
  %v176 = vld [vmem:[%s2 + $0x30] sm:$0xff]
  %v177 = vld [vmem:[%s2 + $0x38] sm:$0xff]
  %v179 = vsel %vm40, %v170, 0
  %v182 = vsel %vm40, %v171, 0
  %v185 = vsel %vm40, %v172, 0
  %v188 = vsel %vm40, %v173, 0
  %v191 = vsel %vm40, %v174, 0
  %v194 = vsel %vm40, %v175, 0
  %v197 = vsel %vm40, %v176, 0
  %v200 = vsel %vm40, %v177, 0
  %202 = vmatprep.subr.mxu0 0.0
  %203 = vmatpush1.msra.mxu0 0.0
  %204 = vmatprep.subr.mxu0 0.0
  %205 = vmatpush1.msra.mxu0 0.0
  %206 = vmatprep.subr.mxu0 0.0
  %207 = vmatpush1.msra.mxu0 0.0
  %208 = vmatprep.subr.mxu0 0.0
  %209 = vmatpush1.msra.mxu0 0.0
  %210 = vmatprep.subr.mxu0 0.0
  %211 = vmatpush1.msra.mxu0 0.0
  %212 = vmatprep.subr.mxu0 0.0
  %213 = vmatpush1.msra.mxu0 0.0
  %214 = vmatprep.subr.mxu0 0.0
  %215 = vmatpush1.msra.mxu0 0.0
  %216 = vmatprep.subr.mxu0 0.0
  %217 = vmatpush1.msra.mxu0 0.0
  %218 = vmatprep.subr.mxu0 0.0
  %219 = vmatpush1.msra.mxu0 0.0
  %220 = vmatprep.subr.mxu0 0.0
  %221 = vmatpush1.msra.mxu0 0.0
  %222 = vmatprep.subr.mxu0 0.0
  %223 = vmatpush1.msra.mxu0 0.0
  %224 = vmatprep.subr.mxu0 0.0
  %225 = vmatpush1.msra.mxu0 0.0
  %226 = vmatprep.subr.mxu0 0.0
  %227 = vmatpush1.msra.mxu0 %v31
  %228 = vmatprep.subr.mxu0 0.0
  %229 = vmatpush1.msra.mxu0 %v30
  %230 = vmatprep.subr.mxu0 0.0
  %231 = vmatpush1.msra.mxu0 %v29
  %232 = vmatprep.subr.mxu0 0.0
  %233 = vmatpush1.msra.mxu0 %v28
  %234 = vmatprep.subr.mxu0 0.0
  %235 = vmatpush2.msra.mxu0 0.0
  %236 = vmatprep.subr.mxu0 0.0
  %237 = vmatpush2.msra.mxu0 0.0
  %238 = vmatprep.subr.mxu0 0.0
  %239 = vmatpush2.msra.mxu0 0.0
  %240 = vmatprep.subr.mxu0 0.0
  %241 = vmatpush2.msra.mxu0 0.0
  %242 = vmatprep.subr.mxu0 0.0
  %243 = vmatpush2.msra.mxu0 0.0
  %244 = vmatprep.subr.mxu0 0.0
  %245 = vmatpush2.msra.mxu0 0.0
  %246 = vmatprep.subr.mxu0 0.0
  %247 = vmatpush2.msra.mxu0 0.0
  %248 = vmatprep.subr.mxu0 0.0
  %249 = vmatpush2.msra.mxu0 0.0
  %250 = vmatprep.subr.mxu0 0.0
  %251 = vmatpush2.msra.mxu0 0.0
  %252 = vmatprep.subr.mxu0 0.0
  %253 = vmatpush2.msra.mxu0 0.0
  %254 = vmatprep.subr.mxu0 0.0
  %255 = vmatpush2.msra.mxu0 0.0
  %256 = vmatprep.subr.mxu0 0.0
  %257 = vmatpush2.msra.mxu0 0.0
  %258 = vmatprep.subr.mxu0 0.0
  %259 = vmatpush2.msra.mxu0 0.0
  %260 = vmatprep.subr.mxu0 0.0
  %261 = vmatpush2.msra.mxu0 0.0
  %262 = vmatprep.subr.mxu0 0.0
  %263 = vmatpush2.msra.mxu0 0.0
  %264 = vmatprep.subr.mxu0 0.0
  %265 = vmatpush2.msra.mxu0 0.0
  %266 = vmatprep.mubr.f32.mxu0 0.0
  %267 = vmatmul.mubr.f32.gmra.mxu0 %v179
  %v268 = vpop.f32.mrf.mxu0
  %v269 = vadd.f32 0.0, %v268
  %v270 = vpop.f32.mrf.mxu0
  %271 = vmatprep.mubr.f32.mxu0 0.0
  %272 = vmatmul.mubr.f32.gmra.mxu0 %v182
  %v273 = vpop.f32.mrf.mxu0
  %v274 = vadd.f32 0.0, %v273
  %v275 = vpop.f32.mrf.mxu0
  %276 = vmatprep.mubr.f32.mxu0 0.0
  %277 = vmatmul.mubr.f32.gmra.mxu0 %v185
  %v278 = vpop.f32.mrf.mxu0
  %v279 = vadd.f32 0.0, %v278
  %v280 = vpop.f32.mrf.mxu0
  %281 = vmatprep.mubr.f32.mxu0 0.0
  %282 = vmatmul.mubr.f32.gmra.mxu0 %v188
  %v283 = vpop.f32.mrf.mxu0
  %v284 = vadd.f32 0.0, %v283
  %v285 = vpop.f32.mrf.mxu0
  %286 = vmatprep.mubr.f32.mxu0 0.0
  %287 = vmatmul.mubr.f32.gmra.mxu0 %v191
  %v288 = vpop.f32.mrf.mxu0
  %v289 = vadd.f32 0.0, %v288
  %v290 = vpop.f32.mrf.mxu0
  %291 = vmatprep.mubr.f32.mxu0 0.0
  %292 = vmatmul.mubr.f32.gmra.mxu0 %v194
  %v293 = vpop.f32.mrf.mxu0
  %v294 = vadd.f32 0.0, %v293
  %v295 = vpop.f32.mrf.mxu0
  %296 = vmatprep.mubr.f32.mxu0 0.0
  %297 = vmatmul.mubr.f32.gmra.mxu0 %v197
  %v298 = vpop.f32.mrf.mxu0
  %v299 = vadd.f32 0.0, %v298
  %v300 = vpop.f32.mrf.mxu0
  %301 = vmatprep.mubr.f32.mxu0 0.0
  %302 = vmatmul.mubr.f32.gmra.mxu0 %v200
  %v303 = vpop.f32.mrf.mxu0
  %v304 = vadd.f32 0.0, %v303
  %v305 = vpop.f32.mrf.mxu0
  %306 = vdwg.mxu0
  %v307 = vld [vmem:[%s4] sm:$0xff]
  %v308 = vld [vmem:[%s4 + $0x8] sm:$0xff]
  %vm309 = vcmask 130048
  %v311 = vsel %vm309, %v269, 0
  %v314 = vsel %vm309, %v274, 0
  %v317 = vsel %vm309, %v279, 0
  %v320 = vsel %vm309, %v284, 0
  %v323 = vsel %vm309, %v289, 0
  %v326 = vsel %vm309, %v294, 0
  %v329 = vsel %vm309, %v299, 0
  %v332 = vsel %vm309, %v304, 0
  %334 = vmatprep.subr.mxu0 0.0
  %335 = vmatpush1.msra.mxu0 0.0
  %336 = vmatprep.subr.mxu0 0.0
  %337 = vmatpush1.msra.mxu0 0.0
  %338 = vmatprep.subr.mxu0 0.0
  %339 = vmatpush1.msra.mxu0 0.0
  %340 = vmatprep.subr.mxu0 0.0
  %341 = vmatpush1.msra.mxu0 0.0
  %342 = vmatprep.subr.mxu0 0.0
  %343 = vmatpush1.msra.mxu0 0.0
  %344 = vmatprep.subr.mxu0 0.0
  %345 = vmatpush1.msra.mxu0 0.0
  %346 = vmatprep.subr.mxu0 0.0
  %347 = vmatpush1.msra.mxu0 0.0
  %348 = vmatprep.subr.mxu0 0.0
  %349 = vmatpush1.msra.mxu0 0.0
  %350 = vmatprep.subr.mxu0 0.0
  %351 = vmatpush1.msra.mxu0 0.0
  %352 = vmatprep.subr.mxu0 0.0
  %353 = vmatpush1.msra.mxu0 0.0
  %354 = vmatprep.subr.mxu0 0.0
  %355 = vmatpush1.msra.mxu0 0.0
  %356 = vmatprep.subr.mxu0 0.0
  %357 = vmatpush1.msra.mxu0 0.0
  %358 = vmatprep.subr.mxu0 0.0
  %359 = vmatpush1.msra.mxu0 0.0
  %360 = vmatprep.subr.mxu0 0.0
  %361 = vmatpush1.msra.mxu0 0.0
  %362 = vmatprep.subr.mxu0 0.0
  %363 = vmatpush1.msra.mxu0 %v308
  %364 = vmatprep.subr.mxu0 0.0
  %365 = vmatpush1.msra.mxu0 %v307
  %366 = vmatprep.subr.mxu0 0.0
  %367 = vmatpush2.msra.mxu0 0.0
  %368 = vmatprep.subr.mxu0 0.0
  %369 = vmatpush2.msra.mxu0 0.0
  %370 = vmatprep.subr.mxu0 0.0
  %371 = vmatpush2.msra.mxu0 0.0
  %372 = vmatprep.subr.mxu0 0.0
  %373 = vmatpush2.msra.mxu0 0.0
  %374 = vmatprep.subr.mxu0 0.0
  %375 = vmatpush2.msra.mxu0 0.0
  %376 = vmatprep.subr.mxu0 0.0
  %377 = vmatpush2.msra.mxu0 0.0
  %378 = vmatprep.subr.mxu0 0.0
  %379 = vmatpush2.msra.mxu0 0.0
  %380 = vmatprep.subr.mxu0 0.0
  %381 = vmatpush2.msra.mxu0 0.0
  %382 = vmatprep.subr.mxu0 0.0
  %383 = vmatpush2.msra.mxu0 0.0
  %384 = vmatprep.subr.mxu0 0.0
  %385 = vmatpush2.msra.mxu0 0.0
  %386 = vmatprep.subr.mxu0 0.0
  %387 = vmatpush2.msra.mxu0 0.0
  %388 = vmatprep.subr.mxu0 0.0
  %389 = vmatpush2.msra.mxu0 0.0
  %390 = vmatprep.subr.mxu0 0.0
  %391 = vmatpush2.msra.mxu0 0.0
  %392 = vmatprep.subr.mxu0 0.0
  %393 = vmatpush2.msra.mxu0 0.0
  %394 = vmatprep.subr.mxu0 0.0
  %395 = vmatpush2.msra.mxu0 0.0
  %396 = vmatprep.subr.mxu0 0.0
  %397 = vmatpush2.msra.mxu0 0.0
  %398 = vmatprep.mubr.f32.mxu0 0.0
  %399 = vmatmul.mubr.f32.gmra.mxu0 %v311
  %v400 = vpop.f32.mrf.mxu0
  %v401 = vadd.f32 0.0, %v400
  %v402 = vpop.f32.mrf.mxu0
  %403 = vmatprep.mubr.f32.mxu0 0.0
  %404 = vmatmul.mubr.f32.gmra.mxu0 %v314
  %v405 = vpop.f32.mrf.mxu0
  %v406 = vadd.f32 0.0, %v405
  %v407 = vpop.f32.mrf.mxu0
  %408 = vmatprep.mubr.f32.mxu0 0.0
  %409 = vmatmul.mubr.f32.gmra.mxu0 %v317
  %v410 = vpop.f32.mrf.mxu0
  %v411 = vadd.f32 0.0, %v410
  %v412 = vpop.f32.mrf.mxu0
  %413 = vmatprep.mubr.f32.mxu0 0.0
  %414 = vmatmul.mubr.f32.gmra.mxu0 %v320
  %v415 = vpop.f32.mrf.mxu0
  %v416 = vadd.f32 0.0, %v415
  %v417 = vpop.f32.mrf.mxu0
  %418 = vmatprep.mubr.f32.mxu0 0.0
  %419 = vmatmul.mubr.f32.gmra.mxu0 %v323
  %v420 = vpop.f32.mrf.mxu0
  %v421 = vadd.f32 0.0, %v420
  %v422 = vpop.f32.mrf.mxu0
  %423 = vmatprep.mubr.f32.mxu0 0.0
  %424 = vmatmul.mubr.f32.gmra.mxu0 %v326
  %v425 = vpop.f32.mrf.mxu0
  %v426 = vadd.f32 0.0, %v425
  %v427 = vpop.f32.mrf.mxu0
  %428 = vmatprep.mubr.f32.mxu0 0.0
  %429 = vmatmul.mubr.f32.gmra.mxu0 %v329
  %v430 = vpop.f32.mrf.mxu0
  %v431 = vadd.f32 0.0, %v430
  %v432 = vpop.f32.mrf.mxu0
  %433 = vmatprep.mubr.f32.mxu0 0.0
  %434 = vmatmul.mubr.f32.gmra.mxu0 %v332
  %v435 = vpop.f32.mrf.mxu0
  %v436 = vadd.f32 0.0, %v435
  %v437 = vpop.f32.mrf.mxu0
  %438 = vdwg.mxu0
  %v439 = vld [vmem:[%s5] sm:$0x1]
  %v441 = vsel %vm309, %v439, 0
  %v444 = vsel %vm309, %v132, 0
  %v447 = vsel %vm309, %v137, 0
  %v450 = vsel %vm309, %v142, 0
  %v453 = vsel %vm309, %v147, 0
  %v456 = vsel %vm309, %v152, 0
  %v459 = vsel %vm309, %v157, 0
  %v462 = vsel %vm309, %v162, 0
  %v465 = vsel %vm309, %v167, 0
  %467 = vmatprep.subr.mxu0 0.0
  %468 = vmatpush1.xpose.msra.mxu0 0.0
  %469 = vmatprep.subr.mxu0 0.0
  %470 = vmatpush1.xpose.msra.mxu0 0.0
  %471 = vmatprep.subr.mxu0 0.0
  %472 = vmatpush1.xpose.msra.mxu0 0.0
  %473 = vmatprep.subr.mxu0 0.0
  %474 = vmatpush1.xpose.msra.mxu0 0.0
  %475 = vmatprep.subr.mxu0 0.0
  %476 = vmatpush1.xpose.msra.mxu0 0.0
  %477 = vmatprep.subr.mxu0 0.0
  %478 = vmatpush1.xpose.msra.mxu0 0.0
  %479 = vmatprep.subr.mxu0 0.0
  %480 = vmatpush1.xpose.msra.mxu0 0.0
  %481 = vmatprep.subr.mxu0 0.0
  %482 = vmatpush1.xpose.msra.mxu0 0.0
  %483 = vmatprep.subr.mxu0 0.0
  %484 = vmatpush1.xpose.msra.mxu0 %v465
  %485 = vmatprep.subr.mxu0 0.0
  %486 = vmatpush1.xpose.msra.mxu0 %v462
  %487 = vmatprep.subr.mxu0 0.0
  %488 = vmatpush1.xpose.msra.mxu0 %v459
  %489 = vmatprep.subr.mxu0 0.0
  %490 = vmatpush1.xpose.msra.mxu0 %v456
  %491 = vmatprep.subr.mxu0 0.0
  %492 = vmatpush1.xpose.msra.mxu0 %v453
  %493 = vmatprep.subr.mxu0 0.0
  %494 = vmatpush1.xpose.msra.mxu0 %v450
  %495 = vmatprep.subr.mxu0 0.0
  %496 = vmatpush1.xpose.msra.mxu0 %v447
  %497 = vmatprep.subr.mxu0 0.0
  %498 = vmatpush1.xpose.msra.mxu0 %v444
  %499 = vmatprep.subr.mxu0 0.0
  %500 = vmatpush2.xpose.msra.mxu0 0.0
  %501 = vmatprep.subr.mxu0 0.0
  %502 = vmatpush2.xpose.msra.mxu0 0.0
  %503 = vmatprep.subr.mxu0 0.0
  %504 = vmatpush2.xpose.msra.mxu0 0.0
  %505 = vmatprep.subr.mxu0 0.0
  %506 = vmatpush2.xpose.msra.mxu0 0.0
  %507 = vmatprep.subr.mxu0 0.0
  %508 = vmatpush2.xpose.msra.mxu0 0.0
  %509 = vmatprep.subr.mxu0 0.0
  %510 = vmatpush2.xpose.msra.mxu0 0.0
  %511 = vmatprep.subr.mxu0 0.0
  %512 = vmatpush2.xpose.msra.mxu0 0.0
  %513 = vmatprep.subr.mxu0 0.0
  %514 = vmatpush2.xpose.msra.mxu0 0.0
  %515 = vmatprep.subr.mxu0 0.0
  %516 = vmatpush2.xpose.msra.mxu0 0.0
  %517 = vmatprep.subr.mxu0 0.0
  %518 = vmatpush2.xpose.msra.mxu0 0.0
  %519 = vmatprep.subr.mxu0 0.0
  %520 = vmatpush2.xpose.msra.mxu0 0.0
  %521 = vmatprep.subr.mxu0 0.0
  %522 = vmatpush2.xpose.msra.mxu0 0.0
  %523 = vmatprep.subr.mxu0 0.0
  %524 = vmatpush2.xpose.msra.mxu0 0.0
  %525 = vmatprep.subr.mxu0 0.0
  %526 = vmatpush2.xpose.msra.mxu0 0.0
  %527 = vmatprep.subr.mxu0 0.0
  %528 = vmatpush2.xpose.msra.mxu0 0.0
  %529 = vmatprep.subr.mxu0 0.0
  %530 = vmatpush2.xpose.msra.mxu0 0.0
  %531 = vmatprep.mubr.f32.mxu0 0.0
  %532 = vmatmul.mubr.f32.gmra.mxu0 %v441
  %v533 = vpop.f32.mrf.mxu0
  %v534 = vadd.f32 0.0, %v533
  %v535 = vpop.f32.mrf.mxu0
  %536 = vdwg.mxu0
  %538 = vset.pattern.permute.xlu0 0
  %539 = vperm.xlu0 %538, %v401
  %v540 = vpop.permute.xlu0 %539
  %543 = vset.pattern.permute.xlu0 0
  %544 = vperm.xlu0 %543, %v406
  %v545 = vpop.permute.xlu0 %544
  %548 = vset.pattern.permute.xlu0 0
  %549 = vperm.xlu0 %548, %v411
  %v550 = vpop.permute.xlu0 %549
  %553 = vset.pattern.permute.xlu0 0
  %554 = vperm.xlu0 %553, %v416
  %v555 = vpop.permute.xlu0 %554
  %558 = vset.pattern.permute.xlu0 0
  %559 = vperm.xlu0 %558, %v421
  %v560 = vpop.permute.xlu0 %559
  %563 = vset.pattern.permute.xlu0 0
  %564 = vperm.xlu0 %563, %v426
  %v565 = vpop.permute.xlu0 %564
  %568 = vset.pattern.permute.xlu0 0
  %569 = vperm.xlu0 %568, %v431
  %v570 = vpop.permute.xlu0 %569
  %573 = vset.pattern.permute.xlu0 0
  %574 = vperm.xlu0 %573, %v436
  %v575 = vpop.permute.xlu0 %574
  %v577 = vlaneseq
  %v578 = vshrl.u32 %v577, 7
  %v579 = vsub.s32 0, %v578
  %v580 = vrot.slane %v534, %v579
  %v581 = vadd.f32 %v540, %v580
  %v582 = vadd.f32 %v545, %v580
  %v583 = vadd.f32 %v550, %v580
  %v584 = vadd.f32 %v555, %v580
  %v585 = vadd.f32 %v560, %v580
  %v586 = vadd.f32 %v565, %v580
  %v587 = vadd.f32 %v570, %v580
  %v588 = vadd.f32 %v575, %v580
  %vm589 = vcmp.gt.f32.partialorder %v581, 0.0
  %vm590 = vcmp.gt.f32.partialorder %v582, 0.0
  %vm591 = vcmp.gt.f32.partialorder %v583, 0.0
  %vm592 = vcmp.gt.f32.partialorder %v584, 0.0
  %vm593 = vcmp.gt.f32.partialorder %v585, 0.0
  %vm594 = vcmp.gt.f32.partialorder %v586, 0.0
  %vm595 = vcmp.gt.f32.partialorder %v587, 0.0
  %vm596 = vcmp.gt.f32.partialorder %v588, 0.0
  %v597 = vmul.f32 %v581, 0.2
  %v598 = vmul.f32 %v582, 0.2
  %v599 = vmul.f32 %v583, 0.2
  %v600 = vmul.f32 %v584, 0.2
  %v601 = vmul.f32 %v585, 0.2
  %v602 = vmul.f32 %v586, 0.2
  %v603 = vmul.f32 %v587, 0.2
  %v604 = vmul.f32 %v588, 0.2
  %v605 = vsel %vm589, %v581, %v597
  %v606 = vsel %vm590, %v582, %v598
  %v607 = vsel %vm591, %v583, %v599
  %v608 = vsel %vm592, %v584, %v600
  %v609 = vsel %vm593, %v585, %v601
  %v610 = vsel %vm594, %v586, %v602
  %v611 = vsel %vm595, %v587, %v603
  %v612 = vsel %vm596, %v588, %v604
  %p613 = scmp.lt.f32.partialorder %s27, 0.0
  %s614 = scalar_select %p613, 1, 0
  %s615 = scvt.s32.f32 %s614
  %s616 = ssub.f32 0.0, %s27
  %p617 = scmp.gt.f32.partialorder %s616, 0.0
  %s618 = scalar_select %p617, 1, 0
  %s619 = scvt.s32.f32 %s618
  %v620 = vld [vmem:[%s6] sm:$0xff]
  %v621 = vld [vmem:[%s6 + $0x8] sm:$0xff]
  %v622 = vunpack.c.0.s8 %v620
  %v623 = vunpack.c.1.s8 %v620
  %v624 = vunpack.c.2.s8 %v620
  %v625 = vunpack.c.3.s8 %v620
  %v626 = vunpack.c.0.s8 %v621
  %v627 = vunpack.c.1.s8 %v621
  %v628 = vunpack.c.2.s8 %v621
  %v629 = vunpack.c.3.s8 %v621
  %v630 = vcvt.s32.f32 %v622
  %v631 = vcvt.s32.f32 %v623
  %v632 = vcvt.s32.f32 %v624
  %v633 = vcvt.s32.f32 %v625
  %v634 = vcvt.s32.f32 %v626
  %v635 = vcvt.s32.f32 %v627
  %v636 = vcvt.s32.f32 %v628
  %v637 = vcvt.s32.f32 %v629
  %vm638 = vcmp.gt.f32.partialorder %v630, 0.0
  %vm639 = vcmp.gt.f32.partialorder %v631, 0.0
  %vm640 = vcmp.gt.f32.partialorder %v632, 0.0
  %vm641 = vcmp.gt.f32.partialorder %v633, 0.0
  %vm642 = vcmp.gt.f32.partialorder %v634, 0.0
  %vm643 = vcmp.gt.f32.partialorder %v635, 0.0
  %vm644 = vcmp.gt.f32.partialorder %v636, 0.0
  %vm645 = vcmp.gt.f32.partialorder %v637, 0.0
  %v646 = vsel %vm638, 1.0, 0.0
  %v647 = vsel %vm639, 1.0, 0.0
  %v648 = vsel %vm640, 1.0, 0.0
  %v649 = vsel %vm641, 1.0, 0.0
  %v650 = vsel %vm642, 1.0, 0.0
  %v651 = vsel %vm643, 1.0, 0.0
  %v652 = vsel %vm644, 1.0, 0.0
  %v653 = vsel %vm645, 1.0, 0.0
  %v654 = vstv %s615
  %v655 = vmax.f32 %v646, %v654
  %v656 = vmax.f32 %v647, %v654
  %v657 = vmax.f32 %v648, %v654
  %v658 = vmax.f32 %v649, %v654
  %v659 = vmax.f32 %v650, %v654
  %v660 = vmax.f32 %v651, %v654
  %v661 = vmax.f32 %v652, %v654
  %v662 = vmax.f32 %v653, %v654
  %s663 = ssub.f32 1.0, %s619
  %v664 = vstv %s663
  %v665 = vmul.f32 %v655, %v664
  %v666 = vmul.f32 %v656, %v664
  %v667 = vmul.f32 %v657, %v664
  %v668 = vmul.f32 %v658, %v664
  %v669 = vmul.f32 %v659, %v664
  %v670 = vmul.f32 %v660, %v664
  %v671 = vmul.f32 %v661, %v664
  %v672 = vmul.f32 %v662, %v664
  %vm673 = vcmp.gt.f32.partialorder %v665, 0.0
  %vm674 = vcmp.gt.f32.partialorder %v666, 0.0
  %vm675 = vcmp.gt.f32.partialorder %v667, 0.0
  %vm676 = vcmp.gt.f32.partialorder %v668, 0.0
  %vm677 = vcmp.gt.f32.partialorder %v669, 0.0
  %vm678 = vcmp.gt.f32.partialorder %v670, 0.0
  %vm679 = vcmp.gt.f32.partialorder %v671, 0.0
  %vm680 = vcmp.gt.f32.partialorder %v672, 0.0
  %v681 = vsel %vm673, %v605, -9e+15
  %v682 = vsel %vm674, %v606, -9e+15
  %v683 = vsel %vm675, %v607, -9e+15
  %v684 = vsel %vm676, %v608, -9e+15
  %v685 = vsel %vm677, %v609, -9e+15
  %v686 = vsel %vm678, %v610, -9e+15
  %v687 = vsel %vm679, %v611, -9e+15
  %v688 = vsel %vm680, %v612, -9e+15
  %vm689 = vcmask 523264
  %v690 = vsel %vm689, %v681, -inf
  %691 = vmax.xlane.f32.xlu0 %v690
  %v692 = vpop.xlane.xlu0 %691
  %v693 = vsel %vm689, %v682, -inf
  %694 = vmax.xlane.f32.xlu0 %v693
  %v695 = vpop.xlane.xlu0 %694
  %v696 = vsel %vm689, %v683, -inf
  %697 = vmax.xlane.f32.xlu0 %v696
  %v698 = vpop.xlane.xlu0 %697
  %v699 = vsel %vm689, %v684, -inf
  %700 = vmax.xlane.f32.xlu0 %v699
  %v701 = vpop.xlane.xlu0 %700
  %v702 = vsel %vm689, %v685, -inf
  %703 = vmax.xlane.f32.xlu0 %v702
  %v704 = vpop.xlane.xlu0 %703
  %v705 = vsel %vm689, %v686, -inf
  %706 = vmax.xlane.f32.xlu0 %v705
  %v707 = vpop.xlane.xlu0 %706
  %v708 = vsel %vm689, %v687, -inf
  %709 = vmax.xlane.f32.xlu0 %v708
  %v710 = vpop.xlane.xlu0 %709
  %v711 = vsel %vm689, %v688, -inf
  %712 = vmax.xlane.f32.xlu0 %v711
  %v713 = vpop.xlane.xlu0 %712
  %v714 = vsub.f32 %v681, %v692
  %v715 = vsub.f32 %v682, %v695
  %v716 = vsub.f32 %v683, %v698
  %v717 = vsub.f32 %v684, %v701
  %v718 = vsub.f32 %v685, %v704
  %v719 = vsub.f32 %v686, %v707
  %v720 = vsub.f32 %v687, %v710
  %v721 = vsub.f32 %v688, %v713
  %v722 = vmul.f32 %v714, 1.442695
  %v723 = vpow.pop %v722
  %v724 = vmul.f32 %v715, 1.442695
  %v725 = vpow.pop %v724
  %v726 = vmul.f32 %v716, 1.442695
  %v727 = vpow.pop %v726
  %v728 = vmul.f32 %v717, 1.442695
  %v729 = vpow.pop %v728
  %v730 = vmul.f32 %v718, 1.442695
  %v731 = vpow.pop %v730
  %v732 = vmul.f32 %v719, 1.442695
  %v733 = vpow.pop %v732
  %v734 = vmul.f32 %v720, 1.442695
  %v735 = vpow.pop %v734
  %v736 = vmul.f32 %v721, 1.442695
  %v737 = vpow.pop %v736
  %v738 = vsel %vm689, %v723, 0.0
  %739 = vadd.xlane.f32.xlu0 %v738
  %v740 = vpop.xlane.xlu0 %739
  %v741 = vsel %vm689, %v725, 0.0
  %742 = vadd.xlane.f32.xlu0 %v741
  %v743 = vpop.xlane.xlu0 %742
  %v744 = vsel %vm689, %v727, 0.0
  %745 = vadd.xlane.f32.xlu0 %v744
  %v746 = vpop.xlane.xlu0 %745
  %v747 = vsel %vm689, %v729, 0.0
  %748 = vadd.xlane.f32.xlu0 %v747
  %v749 = vpop.xlane.xlu0 %748
  %v750 = vsel %vm689, %v731, 0.0
  %751 = vadd.xlane.f32.xlu0 %v750
  %v752 = vpop.xlane.xlu0 %751
  %v753 = vsel %vm689, %v733, 0.0
  %754 = vadd.xlane.f32.xlu0 %v753
  %v755 = vpop.xlane.xlu0 %754
  %v756 = vsel %vm689, %v735, 0.0
  %757 = vadd.xlane.f32.xlu0 %v756
  %v758 = vpop.xlane.xlu0 %757
  %v759 = vsel %vm689, %v737, 0.0
  %760 = vadd.xlane.f32.xlu0 %v759
  %v761 = vpop.xlane.xlu0 %760
  %v762 = vrcp.pop %v740
  %v763 = vmul.f32 1.0, %v762
  %v764 = vrcp.pop %v743
  %v765 = vmul.f32 1.0, %v764
  %v766 = vrcp.pop %v746
  %v767 = vmul.f32 1.0, %v766
  %v768 = vrcp.pop %v749
  %v769 = vmul.f32 1.0, %v768
  %v770 = vrcp.pop %v752
  %v771 = vmul.f32 1.0, %v770
  %v772 = vrcp.pop %v755
  %v773 = vmul.f32 1.0, %v772
  %v774 = vrcp.pop %v758
  %v775 = vmul.f32 1.0, %v774
  %v776 = vrcp.pop %v761
  %v777 = vmul.f32 1.0, %v776
  %v778 = vmul.f32 %v723, %v763
  %v779 = vmul.f32 %v725, %v765
  %v780 = vmul.f32 %v727, %v767
  %v781 = vmul.f32 %v729, %v769
  %v782 = vmul.f32 %v731, %v771
  %v783 = vmul.f32 %v733, %v773
  %v784 = vmul.f32 %v735, %v775
  %v785 = vmul.f32 %v737, %v777
  %v787 = vsel %vm689, %v778, 0
  %v790 = vsel %vm689, %v779, 0
  %v793 = vsel %vm689, %v780, 0
  %v796 = vsel %vm689, %v781, 0
  %v799 = vsel %vm689, %v782, 0
  %v802 = vsel %vm689, %v783, 0
  %v805 = vsel %vm689, %v784, 0
  %v808 = vsel %vm689, %v785, 0
  %810 = vmatprep.subr.mxu0 0.0
  %811 = vmatpush1.msra.mxu0 0.0
  %812 = vmatprep.subr.mxu0 0.0
  %813 = vmatpush1.msra.mxu0 0.0
  %814 = vmatprep.subr.mxu0 0.0
  %815 = vmatpush1.msra.mxu0 0.0
  %816 = vmatprep.subr.mxu0 0.0
  %817 = vmatpush1.msra.mxu0 0.0
  %818 = vmatprep.subr.mxu0 0.0
  %819 = vmatpush1.msra.mxu0 0.0
  %820 = vmatprep.subr.mxu0 0.0
  %821 = vmatpush1.msra.mxu0 0.0
  %822 = vmatprep.subr.mxu0 0.0
  %823 = vmatpush1.msra.mxu0 0.0
  %824 = vmatprep.subr.mxu0 0.0
  %825 = vmatpush1.msra.mxu0 0.0
  %826 = vmatprep.subr.mxu0 0.0
  %827 = vmatpush1.msra.mxu0 %v167
  %828 = vmatprep.subr.mxu0 0.0
  %829 = vmatpush1.msra.mxu0 %v162
  %830 = vmatprep.subr.mxu0 0.0
  %831 = vmatpush1.msra.mxu0 %v157
  %832 = vmatprep.subr.mxu0 0.0
  %833 = vmatpush1.msra.mxu0 %v152
  %834 = vmatprep.subr.mxu0 0.0
  %835 = vmatpush1.msra.mxu0 %v147
  %836 = vmatprep.subr.mxu0 0.0
  %837 = vmatpush1.msra.mxu0 %v142
  %838 = vmatprep.subr.mxu0 0.0
  %839 = vmatpush1.msra.mxu0 %v137
  %840 = vmatprep.subr.mxu0 0.0
  %841 = vmatpush1.msra.mxu0 %v132
  %842 = vmatprep.subr.mxu0 0.0
  %843 = vmatpush2.msra.mxu0 0.0
  %844 = vmatprep.subr.mxu0 0.0
  %845 = vmatpush2.msra.mxu0 0.0
  %846 = vmatprep.subr.mxu0 0.0
  %847 = vmatpush2.msra.mxu0 0.0
  %848 = vmatprep.subr.mxu0 0.0
  %849 = vmatpush2.msra.mxu0 0.0
  %850 = vmatprep.subr.mxu0 0.0
  %851 = vmatpush2.msra.mxu0 0.0
  %852 = vmatprep.subr.mxu0 0.0
  %853 = vmatpush2.msra.mxu0 0.0
  %854 = vmatprep.subr.mxu0 0.0
  %855 = vmatpush2.msra.mxu0 0.0
  %856 = vmatprep.subr.mxu0 0.0
  %857 = vmatpush2.msra.mxu0 0.0
  %858 = vmatprep.subr.mxu0 0.0
  %859 = vmatpush2.msra.mxu0 0.0
  %860 = vmatprep.subr.mxu0 0.0
  %861 = vmatpush2.msra.mxu0 0.0
  %862 = vmatprep.subr.mxu0 0.0
  %863 = vmatpush2.msra.mxu0 0.0
  %864 = vmatprep.subr.mxu0 0.0
  %865 = vmatpush2.msra.mxu0 0.0
  %866 = vmatprep.subr.mxu0 0.0
  %867 = vmatpush2.msra.mxu0 0.0
  %868 = vmatprep.subr.mxu0 0.0
  %869 = vmatpush2.msra.mxu0 0.0
  %870 = vmatprep.subr.mxu0 0.0
  %871 = vmatpush2.msra.mxu0 0.0
  %872 = vmatprep.subr.mxu0 0.0
  %873 = vmatpush2.msra.mxu0 0.0
  %874 = vmatprep.mubr.f32.mxu0 0.0
  %875 = vmatmul.mubr.f32.gmra.mxu0 %v787
  %v876 = vpop.f32.mrf.mxu0
  %v877 = vadd.f32 0.0, %v876
  %v878 = vpop.f32.mrf.mxu0
  %879 = vmatprep.mubr.f32.mxu0 0.0
  %880 = vmatmul.mubr.f32.gmra.mxu0 %v790
  %v881 = vpop.f32.mrf.mxu0
  %v882 = vadd.f32 0.0, %v881
  %v883 = vpop.f32.mrf.mxu0
  %884 = vmatprep.mubr.f32.mxu0 0.0
  %885 = vmatmul.mubr.f32.gmra.mxu0 %v793
  %v886 = vpop.f32.mrf.mxu0
  %v887 = vadd.f32 0.0, %v886
  %v888 = vpop.f32.mrf.mxu0
  %889 = vmatprep.mubr.f32.mxu0 0.0
  %890 = vmatmul.mubr.f32.gmra.mxu0 %v796
  %v891 = vpop.f32.mrf.mxu0
  %v892 = vadd.f32 0.0, %v891
  %v893 = vpop.f32.mrf.mxu0
  %894 = vmatprep.mubr.f32.mxu0 0.0
  %895 = vmatmul.mubr.f32.gmra.mxu0 %v799
  %v896 = vpop.f32.mrf.mxu0
  %v897 = vadd.f32 0.0, %v896
  %v898 = vpop.f32.mrf.mxu0
  %899 = vmatprep.mubr.f32.mxu0 0.0
  %900 = vmatmul.mubr.f32.gmra.mxu0 %v802
  %v901 = vpop.f32.mrf.mxu0
  %v902 = vadd.f32 0.0, %v901
  %v903 = vpop.f32.mrf.mxu0
  %904 = vmatprep.mubr.f32.mxu0 0.0
  %905 = vmatmul.mubr.f32.gmra.mxu0 %v805
  %v906 = vpop.f32.mrf.mxu0
  %v907 = vadd.f32 0.0, %v906
  %v908 = vpop.f32.mrf.mxu0
  %909 = vmatprep.mubr.f32.mxu0 0.0
  %910 = vmatmul.mubr.f32.gmra.mxu0 %v808
  %v911 = vpop.f32.mrf.mxu0
  %v912 = vadd.f32 0.0, %v911
  %v913 = vpop.f32.mrf.mxu0
  %914 = vdwg.mxu0
  %vm915 = vcmp.gt.f32.partialorder %v877, 0.0
  %vm916 = vcmp.gt.f32.partialorder %v882, 0.0
  %vm917 = vcmp.gt.f32.partialorder %v887, 0.0
  %vm918 = vcmp.gt.f32.partialorder %v892, 0.0
  %vm919 = vcmp.gt.f32.partialorder %v897, 0.0
  %vm920 = vcmp.gt.f32.partialorder %v902, 0.0
  %vm921 = vcmp.gt.f32.partialorder %v907, 0.0
  %vm922 = vcmp.gt.f32.partialorder %v912, 0.0
  %v923 = vmul.f32 %v877, 1.442695
  %v924 = vpow.pop %v923
  %v925 = vmul.f32 %v882, 1.442695
  %v926 = vpow.pop %v925
  %v927 = vmul.f32 %v887, 1.442695
  %v928 = vpow.pop %v927
  %v929 = vmul.f32 %v892, 1.442695
  %v930 = vpow.pop %v929
  %v931 = vmul.f32 %v897, 1.442695
  %v932 = vpow.pop %v931
  %v933 = vmul.f32 %v902, 1.442695
  %v934 = vpow.pop %v933
  %v935 = vmul.f32 %v907, 1.442695
  %v936 = vpow.pop %v935
  %v937 = vmul.f32 %v912, 1.442695
  %v938 = vpow.pop %v937
  %v939 = vsub.f32 %v924, 1.0
  %v940 = vsub.f32 %v926, 1.0
  %v941 = vsub.f32 %v928, 1.0
  %v942 = vsub.f32 %v930, 1.0
  %v943 = vsub.f32 %v932, 1.0
  %v944 = vsub.f32 %v934, 1.0
  %v945 = vsub.f32 %v936, 1.0
  %v946 = vsub.f32 %v938, 1.0
  %v947 = vsel %vm915, %v877, %v939
  %v948 = vsel %vm916, %v882, %v940
  %v949 = vsel %vm917, %v887, %v941
  %v950 = vsel %vm918, %v892, %v942
  %v951 = vsel %vm919, %v897, %v943
  %v952 = vsel %vm920, %v902, %v944
  %v953 = vsel %vm921, %v907, %v945
  %v954 = vsel %vm922, %v912, %v946
  %955 = vst.msk [vmem:[%s7] sm:$0xff] %vm309, %v947
  %956 = vst.msk [vmem:[%s7 + $0x8] sm:$0xff] %vm309, %v948
  %957 = vst.msk [vmem:[%s7 + $0x10] sm:$0xff] %vm309, %v949
  %958 = vst.msk [vmem:[%s7 + $0x18] sm:$0xff] %vm309, %v950
  %959 = vst.msk [vmem:[%s7 + $0x20] sm:$0xff] %vm309, %v951
  %960 = vst.msk [vmem:[%s7 + $0x28] sm:$0xff] %vm309, %v952
  %961 = vst.msk [vmem:[%s7 + $0x30] sm:$0xff] %vm309, %v953
  %962 = vst.msk [vmem:[%s7 + $0x38] sm:$0xff] %vm309, %v954
  // Predicated region
  $region30: #{tpu_custom_call.1} parent=0 // pred_check
    _
  $region31: #{tpu_custom_call.1} parent=0 // pred_check_branch
    %964 = sbr.rel (0) target = $region33
  $region32: #{tpu_custom_call.1} parent=0 // pred_region
    _
  $region33: #{tpu_custom_call.1} parent=0 // pred_fallthru
    _
  // Predicated region
  $region34: #{tpu_custom_call.1} parent=0 // pred_check
    _
  $region35: #{tpu_custom_call.1} parent=0 // pred_check_branch
    %966 = sbr.rel (0) target = $region37
  $region36: #{tpu_custom_call.1} parent=0 // pred_region
    _
  $region37: #{tpu_custom_call.1} parent=0 // pred_fallthru
    _

</llo_original>
